<compile_context>
chip_gen: v5e
topology: v5e:2x2
jax: 0.10.0
libtpu: 0.0.40
codegen_flags: <defaults>
</compile_context>

<pallas_src>
import functools

import jax
import jax.numpy as jnp
from jax.experimental import pallas as pl
from jax.experimental.pallas import tpu as pltpu


def _round_up(x, m):
    return (x + m - 1) // m * m


def _patch_embed_kernel(x_ref, w_ref, b_ref, o_ref):
    # x_ref: (tm, Kp) bf16, w_ref: (Kp, Np) bf16, b_ref: (1, Np) f32,
    # o_ref: (tm, Np) out dtype.  f32 MXU accumulation, bias add in f32.
    acc = jnp.dot(x_ref[...], w_ref[...], preferred_element_type=jnp.float32)
    o_ref[...] = (acc + b_ref[...]).astype(o_ref.dtype)


def _device_caps():
    """(tm_cap, vmem_budget_bytes, vmem_limit_bytes) per TPU generation."""
    try:
        kind = jax.devices()[0].device_kind.lower()
    except Exception:  # pragma: no cover - defensive
        kind = ""
    if ("v5" in kind) or ("v6" in kind):
        # 128 MiB physical VMEM: bigger tiles amortize per-step overhead.
        return 1024, 48 * 1024 * 1024, 64 * 1024 * 1024
    # v7x has 64 MiB physical VMEM; unknown devices get the safe setting too.
    return 512, 24 * 1024 * 1024, 32 * 1024 * 1024


def _pick_tm(M, Kp, Np, out_itemsize, tm_cap, vmem_budget):
    """Row tile: as large as fits VMEM, preferring an exact divisor of M.

    Working set: bf16 patch tile (2x buffered) + out tile (2x buffered) +
    bf16 weight (1x, resident) + f32 bias (1x, resident).
    """
    def fits(tm):
        need = (2 * tm * Kp * 2            # bf16 patch tile, double-buffered
                + 2 * tm * Np * out_itemsize  # output tile, double-buffered
                + Kp * Np * 2              # bf16 weight, single-buffered
                + Np * 4)                  # f32 bias, single-buffered
        return need <= vmem_budget

    cap = tm_cap
    while cap > 8 and not fits(cap):
        cap //= 2
    cap = max(8, min(cap, _round_up(M, 8)))
    # Keep >= 2 grid steps whenever M allows it (v7x has 2 TensorCores and the
    # single "parallel" grid axis is the only sharding unit).
    if M >= 16:
        cap = min(cap, max(8, (M // 2) // 8 * 8))
    # Prefer the largest multiple-of-8 divisor of M: Mp == M, no pad, and the
    # post-kernel slice is a metadata no-op.
    for tm in range(cap, 7, -8):
        if M % tm == 0:
            return tm
    return cap  # fall back to padding M up to a multiple of cap


def prepare_patch_params(weight, bias):
    """One-time (init-time) prep of the projection weight/bias.

    weight: (hidden, C, ph, pw), bias: (hidden,)
    Returns (w_mat (Kp, Np) bf16, b_mat (1, Np) f32) with K and N zero-padded
    to lane multiples (128).  Zero columns/rows contribute nothing to the dot.
    """
    hidden = weight.shape[0]
    K = weight.shape[1] * weight.shape[2] * weight.shape[3]
    Kp = _round_up(K, 128)
    Np = _round_up(hidden, 128)
    w_mat = weight.reshape(hidden, K).T.astype(jnp.bfloat16)        # (K, hidden)
    w_mat = jnp.pad(w_mat, ((0, Kp - K), (0, Np - hidden)))
    b_mat = jnp.pad(bias.astype(jnp.float32).reshape(1, hidden),
                    ((0, 0), (0, Np - hidden)))
    return w_mat, b_mat


@functools.partial(jax.jit, static_argnames=("patch_size", "hidden"))
def patch_embedding(x, w_mat, b_mat, *, patch_size, hidden):
    """x: (B, C, H, W) NCHW; w_mat/b_mat from prepare_patch_params.

    Returns (B, num_patches, hidden), matching
    Conv2d(k=patch, stride=patch)(x).flatten(2).transpose(1, 2).
    """
    ph, pw = patch_size
    B, C, H, W = x.shape
    gh, gw = H // ph, W // pw
    num_patches = gh * gw
    K = C * ph * pw
    Kp, Np = w_mat.shape
    M = B * num_patches

    # --- patch extraction: cast to bf16 FIRST (halves any materialized copy),
    #     then layout only (reshape/transpose); XLA may fuse this chain into
    #     the Pallas input DMA via allow_input_fusion. ---
    patches = x.astype(jnp.bfloat16)
    patches = patches.reshape(B, C, gh, ph, gw, pw)
    patches = patches.transpose(0, 2, 4, 1, 3, 5)
    patches = patches.reshape(M, K)
    if Kp != K:
        patches = jnp.pad(patches, ((0, 0), (0, Kp - K)))

    out_dtype = x.dtype
    out_itemsize = jnp.dtype(out_dtype).itemsize
    tm_cap, vmem_budget, vmem_limit = _device_caps()
    tm = _pick_tm(M, Kp, Np, out_itemsize, tm_cap, vmem_budget)
    Mp = _round_up(M, tm)
    if Mp != M:
        patches = jnp.pad(patches, ((0, Mp - M), (0, 0)))

    grid = (Mp // tm,)
    cost = pl.CostEstimate(
        flops=2 * Mp * Kp * Np,
        transcendentals=0,
        bytes_accessed=Mp * Kp * 2 + Kp * Np * 2 + Np * 4 + Mp * Np * out_itemsize,
    )

    out = pl.pallas_call(
        _patch_embed_kernel,
        out_shape=jax.ShapeDtypeStruct((Mp, Np), out_dtype),
        grid_spec=pltpu.PrefetchScalarGridSpec(
            num_scalar_prefetch=0,
            grid=grid,
            in_specs=[
                # Streaming patch rows: default double-buffered pipeline.
                pl.BlockSpec((tm, Kp), lambda i: (i, 0)),
                # Grid-invariant weight: resident, single-buffered.
                pl.BlockSpec((Kp, Np), lambda i: (0, 0),
                             pipeline_mode=pl.Buffered(buffer_count=1)),
                # Grid-invariant bias row: resident, single-buffered.
                pl.BlockSpec((1, Np), lambda i: (0, 0),
                             pipeline_mode=pl.Buffered(buffer_count=1)),
            ],
            out_specs=pl.BlockSpec((tm, Np), lambda i: (i, 0)),
        ),
        compiler_params=pltpu.CompilerParams(
            dimension_semantics=("parallel",),
            vmem_limit_bytes=vmem_limit,
            # Let XLA fuse the bf16-cast/reshape/transpose/pad chain into the
            # kernel's input DMA instead of materializing it in HBM first.
            allow_input_fusion=[True, False, False],
        ),
        cost_estimate=cost,
    )(patches, w_mat, b_mat)

    # For typical ViT shapes (hidden % 128 == 0 and tm | M) this slice is a
    # metadata no-op; only ragged shapes pay for it.
    if Mp != M or Np != hidden:
        out = out[:M, :hidden]
    return out.reshape(B, num_patches, hidden)


def _reference(x, weight, bias, patch_size):
    # Pure-JAX reference: lax.conv with stride == kernel, then flatten/transpose.
    y = jax.lax.conv_general_dilated(
        x, weight, window_strides=patch_size, padding="VALID",
        dimension_numbers=("NCHW", "OIHW", "NCHW"),
    ) + bias.reshape(1, -1, 1, 1)
    B, hid, gh, gw = y.shape
    return y.reshape(B, hid, gh * gw).transpose(0, 2, 1)


if __name__ == "__main__":
    # Small, self-consistent shapes: img 16x16, patch 8x8, 4 channels, hidden 32.
    B, C, H, W = 2, 4, 16, 16
    ph, pw = 8, 8
    hidden = 32

    key = jax.random.PRNGKey(0)
    kx, kw, kb = jax.random.split(key, 3)
    x = jax.random.normal(kx, (B, C, H, W), dtype=jnp.float32)
    weight = jax.random.normal(kw, (hidden, C, ph, pw), dtype=jnp.float32) * 0.02
    bias = jax.random.normal(kb, (hidden,), dtype=jnp.float32) * 0.02

    # Weight/bias prep hoisted out of the hot path (done once at "init").
    w_mat, b_mat = prepare_patch_params(weight, bias)

    out = patch_embedding(x, w_mat, b_mat, patch_size=(ph, pw), hidden=hidden)
    out = jax.block_until_ready(out)

    ref = _reference(x, weight, bias, (ph, pw))
    assert out.shape == (B, (H // ph) * (W // pw), hidden), out.shape
    # bf16 MXU inputs with f32 accumulation: ~1e-3-level deltas vs f32 conv.
    assert jnp.allclose(out, ref, atol=2e-2, rtol=2e-2), "mismatch vs reference"

    print("KERNEL_OK")
</pallas_src>

<mosaic_0001>
module attributes {stable_mosaic.version = 11 : i64} {
  func.func @_patch_embed_kernel(%arg0: i32, %arg1: memref<8x256xbf16, #tpu.memory_space<vmem>>, %arg2: memref<256x128xbf16, #tpu.memory_space<vmem>>, %arg3: memref<1x128xf32, #tpu.memory_space<vmem>>, %arg4: memref<8x128xf32, #tpu.memory_space<vmem>>) attributes {dimension_semantics = [#tpu.dimension_semantics<parallel>], iteration_bounds = array<i64: 1>, scalar_prefetch = 0 : i64, scratch_operands = 0 : i64, tpu.core_type = #tpu.core_type<tc>, window_params = [{transform_indices = @transform_0, window_bounds = array<i64: 8, 256>}, {pipeline_mode = #tpu.pipeline_mode<synchronous>, transform_indices = @transform_1, window_bounds = array<i64: 256, 128>}, {pipeline_mode = #tpu.pipeline_mode<synchronous>, transform_indices = @transform_2, window_bounds = array<i64: 1, 128>}, {transform_indices = @transform_3, window_bounds = array<i64: 8, 128>}]} {
    %c0 = arith.constant 0 : index
    %c0_0 = arith.constant 0 : index
    %0 = vector.load %arg1[%c0, %c0_0] : memref<8x256xbf16, #tpu.memory_space<vmem>>, vector<8x256xbf16>
    %c0_1 = arith.constant 0 : index
    %c0_2 = arith.constant 0 : index
    %1 = vector.load %arg2[%c0_1, %c0_2] : memref<256x128xbf16, #tpu.memory_space<vmem>>, vector<256x128xbf16>
    %cst = arith.constant dense<0.000000e+00> : vector<8x128xf32>
    %2 = tpu.matmul %0, %1, %cst {dimension_numbers = #tpu.dot_dimension_numbers<[1], [0], [0], [1], [0, 0, 1, 1], [], []>} : vector<8x256xbf16>, vector<256x128xbf16>, vector<8x128xf32> -> vector<8x128xf32>
    %c0_3 = arith.constant 0 : index
    %c0_4 = arith.constant 0 : index
    %3 = vector.load %arg3[%c0_3, %c0_4] : memref<1x128xf32, #tpu.memory_space<vmem>>, vector<1x128xf32>
    %4 = vector.broadcast %3 : vector<1x128xf32> to vector<8x128xf32>
    %5 = arith.addf %2, %4 : vector<8x128xf32>
    %c0_5 = arith.constant 0 : index
    %c0_6 = arith.constant 0 : index
    %6 = vector.load %arg4[%c0_5, %c0_6] : memref<8x128xf32, #tpu.memory_space<vmem>>, vector<8x128xf32>
    tpu.vector_store %arg4[%c0_5, %c0_6], %5 {strides = array<i32>} : memref<8x128xf32, #tpu.memory_space<vmem>>, vector<8x128xf32>,
    return
  }
  func.func @transform_0(%arg0: i32) -> (i32, i32) {
    %c0_i32 = arith.constant 0 : i32
    %c0_i32_0 = arith.constant 0 : i32
    return %arg0, %c0_i32 : i32, i32
  }
  func.func @transform_1(%arg0: i32) -> (i32, i32) {
    %c0_i32 = arith.constant 0 : i32
    %c0_i32_0 = arith.constant 0 : i32
    %c0_i32_1 = arith.constant 0 : i32
    return %c0_i32, %c0_i32_0 : i32, i32
  }
  func.func @transform_2(%arg0: i32) -> (i32, i32) {
    %c0_i32 = arith.constant 0 : i32
    %c0_i32_0 = arith.constant 0 : i32
    %c0_i32_1 = arith.constant 0 : i32
    return %c0_i32, %c0_i32_0 : i32, i32
  }
  func.func @transform_3(%arg0: i32) -> (i32, i32) {
    %c0_i32 = arith.constant 0 : i32
    %c0_i32_0 = arith.constant 0 : i32
    return %arg0, %c0_i32 : i32, i32
  }
}

</mosaic_0001>

<llo_original>
// kernel: patch_embedding.1
$region0: #{patch_embedding.1}
  #allocation0 [shape = 'u32[]', space=smem, size = 0x4, offset = 0x4, fixed_abs, tag = 'smem constant byte address 0x4 - core index']
  #allocation1 [shape = 'u32[72,128]{1,0:T(1,128)}', space=vmem, size = 0x9000, scoped, tag = 'internal scratch']
  %s0 = inlined_call_operand.vmem [shape: bf16[8,256], index: 0, kind: input, shape index: {}]
  %s1 = inlined_call_operand.vmem [shape: bf16[256,128], index: 1, kind: input, shape index: {}]
  %s2 = inlined_call_operand.vmem [shape: f32[1,128], index: 2, kind: input, shape index: {}]
  %s3 = inlined_call_operand.hbm [shape: f32[8,128], index: 3, kind: output, shape index: {}]
  %s4 = sld [smem:[#allocation0]]
  $region22: #{patch_embedding.1} parent=0
    _
  %s6 = ssub.s32 1, %s4
  %s7 = scalar_select 0, %s6, %s4
  $region1: #{patch_embedding.1} parent=0
    #allocation2 [shape = 'u8[4096]{0}', space=vmem, size = 0x1000, scoped, tag = 'output window, operand 0, single buffered']
    #allocation3 [shape = 's32[1]{0}', space=sflag, size = 0x4, scoped, tag = 'scoped memory for patch_embedding.1']
    %8 = vsyncpa [#allocation3], 0
    // Predicated region
    $region2: #{patch_embedding.1} parent=1 // pred_check
      _
    $region3: #{patch_embedding.1} parent=1 // pred_check_branch
      %10 = sbr.rel (0) target = $region5
    $region4: #{patch_embedding.1} parent=1 // pred_region
      _
    $region5: #{patch_embedding.1} parent=1 // pred_fallthru
      _
    // Predicated region
    $region6: #{patch_embedding.1} parent=1 // pred_check
      _
    $region7: #{patch_embedding.1} parent=1 // pred_check_branch
      %12 = sbr.rel (0) target = $region9
    $region8: #{patch_embedding.1} parent=1 // pred_region
      _
    $region9: #{patch_embedding.1} parent=1 // pred_fallthru
      _
    // Predicated region
    $region10: #{patch_embedding.1} parent=1 // pred_check
      _
    $region11: #{patch_embedding.1} parent=1 // pred_check_branch
      %14 = sbr.rel (0) target = $region13
    $region12: #{patch_embedding.1} parent=1 // pred_region
      _
    $region13: #{patch_embedding.1} parent=1 // pred_fallthru
      _
    %v15 = vld [vmem:[%s0] sm:$0xff]
    %v16 = vld [vmem:[%s1] sm:$0xf]
    %v17 = vld [vmem:[%s1 + $0x4] sm:$0xf]
    %v18 = vld [vmem:[%s1 + $0x8] sm:$0xf]
    %v19 = vld [vmem:[%s1 + $0xc] sm:$0xf]
    %v20 = vld [vmem:[%s1 + $0x10] sm:$0xf]
    %v21 = vld [vmem:[%s1 + $0x14] sm:$0xf]
    %v22 = vld [vmem:[%s1 + $0x18] sm:$0xf]
    %v23 = vld [vmem:[%s1 + $0x1c] sm:$0xf]
    %v24 = vld [vmem:[%s1 + $0x20] sm:$0xf]
    %v25 = vld [vmem:[%s1 + $0x24] sm:$0xf]
    %v26 = vld [vmem:[%s1 + $0x28] sm:$0xf]
    %v27 = vld [vmem:[%s1 + $0x2c] sm:$0xf]
    %v28 = vld [vmem:[%s1 + $0x30] sm:$0xf]
    %v29 = vld [vmem:[%s1 + $0x34] sm:$0xf]
    %v30 = vld [vmem:[%s1 + $0x38] sm:$0xf]
    %v31 = vld [vmem:[%s1 + $0x3c] sm:$0xf]
    %v32 = vld [vmem:[%s1 + $0x40] sm:$0xf]
    %v33 = vld [vmem:[%s1 + $0x44] sm:$0xf]
    %v34 = vld [vmem:[%s1 + $0x48] sm:$0xf]
    %v35 = vld [vmem:[%s1 + $0x4c] sm:$0xf]
    %v36 = vld [vmem:[%s1 + $0x50] sm:$0xf]
    %v37 = vld [vmem:[%s1 + $0x54] sm:$0xf]
    %v38 = vld [vmem:[%s1 + $0x58] sm:$0xf]
    %v39 = vld [vmem:[%s1 + $0x5c] sm:$0xf]
    %v40 = vld [vmem:[%s1 + $0x60] sm:$0xf]
    %v41 = vld [vmem:[%s1 + $0x64] sm:$0xf]
    %v42 = vld [vmem:[%s1 + $0x68] sm:$0xf]
    %v43 = vld [vmem:[%s1 + $0x6c] sm:$0xf]
    %v44 = vld [vmem:[%s1 + $0x70] sm:$0xf]
    %v45 = vld [vmem:[%s1 + $0x74] sm:$0xf]
    %v46 = vld [vmem:[%s1 + $0x78] sm:$0xf]
    %v47 = vld [vmem:[%s1 + $0x7c] sm:$0xf]
    %v48 = vld [vmem:[%s2] sm:$0x1]
    %v50 = vperm.slane %v48, 0
    %v53 = vunpack.c.l.b16 %v15
    %v54 = vunpack.c.h.b16 %v15
    %v55 = vpack.c.b16 %v53, %v53
    %v56 = vpack.c.b16 %v54, %v54
    %v91 = vunpack.c.l.b16 %v16
    %v92 = vunpack.c.l.b16 %v17
    %v93 = vunpack.c.l.b16 %v18
    %v94 = vunpack.c.l.b16 %v19
    %v95 = vunpack.c.l.b16 %v20
    %v96 = vunpack.c.l.b16 %v21
    %v97 = vunpack.c.l.b16 %v22
    %v98 = vunpack.c.l.b16 %v23
    %v99 = vunpack.c.l.b16 %v24
    %v100 = vunpack.c.l.b16 %v25
    %v101 = vunpack.c.l.b16 %v26
    %v102 = vunpack.c.l.b16 %v27
    %v103 = vunpack.c.l.b16 %v28
    %v104 = vunpack.c.l.b16 %v29
    %v105 = vunpack.c.l.b16 %v30
    %v106 = vunpack.c.l.b16 %v31
    %v107 = vunpack.c.l.b16 %v32
    %v108 = vunpack.c.l.b16 %v33
    %v109 = vunpack.c.l.b16 %v34
    %v110 = vunpack.c.l.b16 %v35
    %v111 = vunpack.c.l.b16 %v36
    %v112 = vunpack.c.l.b16 %v37
    %v113 = vunpack.c.l.b16 %v38
    %v114 = vunpack.c.l.b16 %v39
    %v115 = vunpack.c.l.b16 %v40
    %v116 = vunpack.c.l.b16 %v41
    %v117 = vunpack.c.l.b16 %v42
    %v118 = vunpack.c.l.b16 %v43
    %v119 = vunpack.c.l.b16 %v44
    %v120 = vunpack.c.l.b16 %v45
    %v121 = vunpack.c.l.b16 %v46
    %v122 = vunpack.c.l.b16 %v47
    %v123 = vpack.c.b16 %v92, %v91
    %v124 = vpack.c.b16 %v94, %v93
    %v125 = vpack.c.b16 %v96, %v95
    %v126 = vpack.c.b16 %v98, %v97
    %v127 = vpack.c.b16 %v100, %v99
    %v128 = vpack.c.b16 %v102, %v101
    %v129 = vpack.c.b16 %v104, %v103
    %v130 = vpack.c.b16 %v106, %v105
    %v131 = vpack.c.b16 %v108, %v107
    %v132 = vpack.c.b16 %v110, %v109
    %v133 = vpack.c.b16 %v112, %v111
    %v134 = vpack.c.b16 %v114, %v113
    %v135 = vpack.c.b16 %v116, %v115
    %v136 = vpack.c.b16 %v118, %v117
    %v137 = vpack.c.b16 %v120, %v119
    %v138 = vpack.c.b16 %v122, %v121
    %155 = vmatpush.bf16.msra.mxu0 %v130
    %156 = vmatpush.bf16.msra.mxu0 %v129
    %157 = vmatpush.bf16.msra.mxu0 %v128
    %158 = vmatpush.bf16.msra.mxu0 %v127
    %159 = vmatpush.bf16.msra.mxu0 %v126
    %160 = vmatpush.bf16.msra.mxu0 %v125
    %161 = vmatpush.bf16.msra.mxu0 %v124
    %162 = vmatpush.bf16.msra.mxu0 %v123
    %163 = vmatmul.bf16.gmra.mxu0 %v55
    %v164 = vpop.f32.mrf.mxu0
    %v165 = vadd.f32 %v50, %v164
    %v166 = vpop.f32.mrf.mxu0
    %167 = vdwg.mxu0
    %168 = vmatpush.bf16.msra.mxu0 %v138
    %169 = vmatpush.bf16.msra.mxu0 %v137
    %170 = vmatpush.bf16.msra.mxu0 %v136
    %171 = vmatpush.bf16.msra.mxu0 %v135
    %172 = vmatpush.bf16.msra.mxu0 %v134
    %173 = vmatpush.bf16.msra.mxu0 %v133
    %174 = vmatpush.bf16.msra.mxu0 %v132
    %175 = vmatpush.bf16.msra.mxu0 %v131
    %176 = vmatmul.bf16.gmra.mxu0 %v56
    %v177 = vpop.f32.mrf.mxu0
    %v178 = vadd.f32 %v165, %v177
    %v179 = vpop.f32.mrf.mxu0
    %180 = vdwg.mxu0
    %181 = vst [vmem:[#allocation2] sm:$0xff] %v178
    // Predicated region
    $region14: #{patch_embedding.1} parent=1 // pred_check
      _
    $region15: #{patch_embedding.1} parent=1 // pred_check_branch
      %183 = sbr.rel (0) target = $region17
    $region16: #{patch_embedding.1} parent=1 // pred_region
      %185 = vsyncadd [#allocation3], 0
      %s187 = sshll.u32 [#allocation2], 4
      %s188 = int_to_ptr.vmem [resolvable:$true] %s187
      %s189 = sshll.u32 %s3, 4
      %s190 = int_to_ptr.hbm [resolvable:$true] %s189
      %192 = dma.vmem_to_hbm [thread:$0]  %s188, 128, %s190, [#allocation3]
    $region17: #{patch_embedding.1} parent=1 // pred_fallthru
      _
    // Predicated region
    $region18: #{patch_embedding.1} parent=1 // pred_check
      _
    $region19: #{patch_embedding.1} parent=1 // pred_check_branch
      %194 = sbr.rel (0) target = $region21
    $region20: #{patch_embedding.1} parent=1 // pred_region
      %196 = dma.done [#allocation3], 128
    $region21: #{patch_embedding.1} parent=1 // pred_fallthru
      _
    %197 = vsyncpa [#allocation3], 1

</llo_original>
